<compile_context>
chip_gen: v5e
topology: v5e:2x2
jax: 0.10.0
libtpu: 0.0.40
codegen_flags: <defaults>
</compile_context>

<pallas_src>
import jax
import jax.numpy as jnp
from jax.experimental import pallas as pl
from jax.experimental.pallas import tpu as pltpu

CLOUD_FLAGS = (1 << 3) | (1 << 4) | (1 << 1)  # 26

_PLANES = 8          # 7 input planes + 1 output plane resident per block
_BUFS = 2            # default double buffering (do NOT deepen: mem-bound)
_ELEM_BYTES = 4      # float32
_STEP_BYTES_PER_ELEM = _BUFS * _PLANES * _ELEM_BYTES  # 64 B per pixel/step


def cloud_detect_kernel(x_ref, o_ref):
    # x_ref: (7, TH, TW) float32 block, o_ref: (TH, TW) float32 block
    # Sum the 6 spectral bands one at a time (keeps only ~2 live tiles).
    # isnan(sum) == isnan(mean) (mean = sum / 6), so this matches the
    # mean-based reference exactly, including the inf + (-inf) -> NaN case.
    total = x_ref[0, :, :]
    for b in range(1, 6):
        total = total + x_ref[b, :, :]
    nan_in_mean = jnp.isnan(total)

    # QA band: truncate-to-int (matches torch .int()), bitwise flag test.
    qa_int = x_ref[6, :, :].astype(jnp.int32)
    cloudy = (qa_int & CLOUD_FLAGS) != 0

    # Single fused select: NaN where cloudy or any-NaN mean, else 1.0.
    o_ref[...] = jnp.where(cloudy | nan_in_mean,
                           jnp.float32(jnp.nan),
                           jnp.float32(1.0)).astype(o_ref.dtype)


def _tpu_params():
    """(per-core VMEM bytes, #TensorCores) with conservative v7x fallback."""
    vmem_cap = 64 << 20   # v7x: 64 MiB / TC (v5e/v6e have 128 MiB)
    num_cores = 2         # v7x: 2 TCs / chip (v5e/v6e have 1)
    try:
        info = pltpu.get_tpu_info()
        vmem_cap = int(info.vmem_capacity_bytes)
        # Heuristic: the only generation with <=64 MiB VMEM/TC is v7x (2 TCs).
        reported = getattr(info, "num_tensor_cores", None)
        num_cores = int(reported) if reported else (2 if vmem_cap <= (64 << 20) else 1)
    except Exception:
        pass
    return vmem_cap, num_cores


def _select_tiles(H, W, vmem_cap, num_cores):
    """Pick (tile_h, tile_w) sized to this generation's VMEM + core count."""
    # Budget for the pipelined block buffers: at most half of per-TC VMEM and
    # never above 48 MiB (plateau region), leaving headroom for compiler
    # scratch -- especially important on v7x's 64 MiB per TC.
    footprint_budget = min(vmem_cap // 2, 48 << 20)

    # Full-width tiles whenever even an 8-row full-W block fits the budget
    # (W up to ~16K on v5e/v6e, ~8K on v7x -> one contiguous slab per plane
    # per grid step).  Only truly huge widths fall back to 2048-col tiles.
    if _STEP_BYTES_PER_ELEM * 8 * W <= footprint_budget:
        tile_w = W
    else:
        tile_w = 2048  # large multiple of 128 -> unmasked lane-dense stores

    # Max rows that fit the footprint budget (multiple of 8, sane cap).
    max_h = footprint_budget // (_STEP_BYTES_PER_ELEM * tile_w)
    tile_h = max(8, min(512, (max_h // 8) * 8))

    # Megacore (v7x): keep >= 2 blocks per TensorCore along the parallel H
    # axis when the image is tall enough, so the grid never collapses onto a
    # single core.  Shrinking blocks costs <1% per-step overhead here.
    if num_cores > 1:
        min_blocks = 2 * num_cores
        target_h = ((pl.cdiv(H, min_blocks) + 7) // 8) * 8
        target_h = max(8, target_h)
        if target_h < tile_h:
            tile_h = target_h

    if tile_h >= H:
        tile_h = H            # full extent (legal even if H % 8 != 0)
    return int(tile_h), int(tile_w)


def landsat_cloud_detector(x, *, tile_h=None, tile_w=None):
    """x: (7, H, W) float32 -> (H, W) float32 mask (1.0 or NaN)."""
    C, H, W = x.shape
    assert C == 7, "expects 6 spectral bands + 1 QA band"

    vmem_cap, num_cores = _tpu_params()
    auto_th, auto_tw = _select_tiles(H, W, vmem_cap, num_cores)
    th = auto_th if tile_h is None else int(tile_h)
    tw = auto_tw if tile_w is None else int(tile_w)

    # Truthful scoped-VMEM limit: actual double-buffered block footprint plus
    # a few MiB of margin for compiler-internal scratch, bounded away from
    # physical capacity (no blanket 75%-of-chip, no double headroom).
    block_bytes = _STEP_BYTES_PER_ELEM * th * tw
    vmem_limit = max(16 << 20, min(block_bytes + (8 << 20), vmem_cap - (8 << 20)))

    if tw == W:
        # Full-width tiles: 1-D grid over H only (single parallel axis).
        grid = (pl.cdiv(H, th),)
        in_specs = [pl.BlockSpec((7, th, W), lambda i: (0, i, 0))]
        out_specs = pl.BlockSpec((th, W), lambda i: (i, 0))
        dim_semantics = ("parallel",)
    else:
        grid = (pl.cdiv(H, th), pl.cdiv(W, tw))
        in_specs = [pl.BlockSpec((7, th, tw), lambda i, j: (0, i, j))]
        out_specs = pl.BlockSpec((th, tw), lambda i, j: (i, j))
        dim_semantics = ("parallel", "parallel")

    return pl.pallas_call(
        cloud_detect_kernel,
        out_shape=jax.ShapeDtypeStruct((H, W), jnp.float32),
        grid_spec=pltpu.PrefetchScalarGridSpec(
            num_scalar_prefetch=0,
            grid=grid,
            in_specs=in_specs,
            out_specs=out_specs,
        ),
        compiler_params=pltpu.CompilerParams(
            dimension_semantics=dim_semantics,
            vmem_limit_bytes=int(vmem_limit),
        ),
        cost_estimate=pl.CostEstimate(
            flops=7 * H * W,               # 5 adds + and + select per pixel
            transcendentals=0,
            bytes_accessed=8 * H * W * 4,  # 7 planes read + 1 plane written
        ),
    )(x)


def _reference(x):
    # Pure-JAX reference mirroring the PyTorch forward.
    qa = x[6]
    mask_band = jnp.mean(x[:6], axis=0)
    mask_band = jnp.where(jnp.isnan(mask_band), jnp.nan, 1.0)
    clear = (qa.astype(jnp.int32) & CLOUD_FLAGS) == 0
    cloud_mask = jnp.where(clear, 1.0, jnp.nan)
    return cloud_mask * mask_band


def _make_input(key, H, W):
    k1, k2, k3 = jax.random.split(key, 3)
    spectral = jax.random.normal(k1, (6, H, W), dtype=jnp.float32)
    nan_mask = jax.random.uniform(k2, (6, H, W)) < 0.1
    spectral = jnp.where(nan_mask, jnp.nan, spectral)
    qa = jax.random.randint(k3, (H, W), 0, 256).astype(jnp.float32)
    return jnp.concatenate([spectral, qa[None]], axis=0)  # (7, H, W)


def _check(x, **kw):
    out = jax.block_until_ready(landsat_cloud_detector(x, **kw))
    ref = jax.block_until_ready(_reference(x))
    assert out.shape == ref.shape and out.dtype == jnp.float32
    same = jnp.all((out == ref) | (jnp.isnan(out) & jnp.isnan(ref)))
    assert bool(same), "mismatch vs reference"


if __name__ == "__main__":
    key = jax.random.PRNGKey(0)
    k0, k1, k2, k3 = jax.random.split(key, 4)

    # Auto tiles: full-width 1-D grid (and multi-block along H on v7x).
    _check(_make_input(k0, 48, 256))
    # Forced full-width small rows: multi-block 1-D grid on every chip.
    _check(_make_input(k1, 48, 256), tile_h=8)
    # Forced narrow columns: exercises the 2-D multi-block grid path.
    _check(_make_input(k2, 48, 256), tile_h=16, tile_w=128)
    # Non-multiple H: exercises padded/masked edge blocks via pl.cdiv grid.
    _check(_make_input(k3, 40, 256), tile_h=16, tile_w=128)

    print("KERNEL_OK")
</pallas_src>

<mosaic_0001>
module attributes {stable_mosaic.version = 11 : i64} {
  func.func @cloud_detect_kernel(%arg0: i32, %arg1: memref<7x16x256xf32, #tpu.memory_space<vmem>>, %arg2: memref<16x256xf32, #tpu.memory_space<vmem>>) attributes {dimension_semantics = [#tpu.dimension_semantics<parallel>], iteration_bounds = array<i64: 3>, scalar_prefetch = 0 : i64, scratch_operands = 0 : i64, tpu.core_type = #tpu.core_type<tc>, window_params = [{transform_indices = @transform_0, window_bounds = array<i64: 7, 16, 256>}, {transform_indices = @transform_1, window_bounds = array<i64: 16, 256>}]} {
    %c0 = arith.constant 0 : index
    %c0_0 = arith.constant 0 : index
    %c0_1 = arith.constant 0 : index
    %0 = vector.load %arg1[%c0, %c0_0, %c0_1] : memref<7x16x256xf32, #tpu.memory_space<vmem>>, vector<1x16x256xf32>
    %1 = vector.shape_cast %0 : vector<1x16x256xf32> to vector<16x256xf32>
    %c1 = arith.constant 1 : index
    %c0_2 = arith.constant 0 : index
    %c0_3 = arith.constant 0 : index
    %2 = vector.load %arg1[%c1, %c0_2, %c0_3] : memref<7x16x256xf32, #tpu.memory_space<vmem>>, vector<1x16x256xf32>
    %3 = vector.shape_cast %2 : vector<1x16x256xf32> to vector<16x256xf32>
    %4 = arith.addf %1, %3 : vector<16x256xf32>
    %c2 = arith.constant 2 : index
    %c0_4 = arith.constant 0 : index
    %c0_5 = arith.constant 0 : index
    %5 = vector.load %arg1[%c2, %c0_4, %c0_5] : memref<7x16x256xf32, #tpu.memory_space<vmem>>, vector<1x16x256xf32>
    %6 = vector.shape_cast %5 : vector<1x16x256xf32> to vector<16x256xf32>
    %7 = arith.addf %4, %6 : vector<16x256xf32>
    %c3 = arith.constant 3 : index
    %c0_6 = arith.constant 0 : index
    %c0_7 = arith.constant 0 : index
    %8 = vector.load %arg1[%c3, %c0_6, %c0_7] : memref<7x16x256xf32, #tpu.memory_space<vmem>>, vector<1x16x256xf32>
    %9 = vector.shape_cast %8 : vector<1x16x256xf32> to vector<16x256xf32>
    %10 = arith.addf %7, %9 : vector<16x256xf32>
    %c4 = arith.constant 4 : index
    %c0_8 = arith.constant 0 : index
    %c0_9 = arith.constant 0 : index
    %11 = vector.load %arg1[%c4, %c0_8, %c0_9] : memref<7x16x256xf32, #tpu.memory_space<vmem>>, vector<1x16x256xf32>
    %12 = vector.shape_cast %11 : vector<1x16x256xf32> to vector<16x256xf32>
    %13 = arith.addf %10, %12 : vector<16x256xf32>
    %c5 = arith.constant 5 : index
    %c0_10 = arith.constant 0 : index
    %c0_11 = arith.constant 0 : index
    %14 = vector.load %arg1[%c5, %c0_10, %c0_11] : memref<7x16x256xf32, #tpu.memory_space<vmem>>, vector<1x16x256xf32>
    %15 = vector.shape_cast %14 : vector<1x16x256xf32> to vector<16x256xf32>
    %16 = arith.addf %13, %15 : vector<16x256xf32>
    %17 = arith.cmpf one, %16, %16 : vector<16x256xf32>
    %c6 = arith.constant 6 : index
    %c0_12 = arith.constant 0 : index
    %c0_13 = arith.constant 0 : index
    %18 = vector.load %arg1[%c6, %c0_12, %c0_13] : memref<7x16x256xf32, #tpu.memory_space<vmem>>, vector<1x16x256xf32>
    %19 = vector.shape_cast %18 : vector<1x16x256xf32> to vector<16x256xf32>
    %20 = arith.fptosi %19 : vector<16x256xf32> to vector<16x256xi32>
    %c26_i32 = arith.constant 26 : i32
    %21 = vector.broadcast %c26_i32 : i32 to vector<16x256xi32>
    %22 = arith.andi %20, %21 : vector<16x256xi32>
    %c0_i32 = arith.constant 0 : i32
    %23 = vector.broadcast %c0_i32 : i32 to vector<16x256xi32>
    %24 = arith.cmpi ne, %22, %23 : vector<16x256xi32>
    %25 = arith.ori %24, %17 : vector<16x256xi1>
    %cst = arith.constant 0x7FC00000 : f32
    %cst_14 = arith.constant 1.000000e+00 : f32
    %26 = vector.broadcast %cst : f32 to vector<16x256xf32>
    %27 = vector.broadcast %cst_14 : f32 to vector<16x256xf32>
    %28 = arith.select %25, %26, %27 : vector<16x256xi1>, vector<16x256xf32>
    %c0_15 = arith.constant 0 : index
    %c0_16 = arith.constant 0 : index
    %29 = vector.load %arg2[%c0_15, %c0_16] : memref<16x256xf32, #tpu.memory_space<vmem>>, vector<16x256xf32>
    tpu.vector_store %arg2[%c0_15, %c0_16], %28 {strides = array<i32>} : memref<16x256xf32, #tpu.memory_space<vmem>>, vector<16x256xf32>,
    return
  }
  func.func @transform_0(%arg0: i32) -> (i32, i32, i32) {
    %c0_i32 = arith.constant 0 : i32
    %c0_i32_0 = arith.constant 0 : i32
    %c0_i32_1 = arith.constant 0 : i32
    return %c0_i32, %arg0, %c0_i32_0 : i32, i32, i32
  }
  func.func @transform_1(%arg0: i32) -> (i32, i32) {
    %c0_i32 = arith.constant 0 : i32
    %c0_i32_0 = arith.constant 0 : i32
    return %arg0, %c0_i32 : i32, i32
  }
}

</mosaic_0001>

<llo_original>
// kernel: tpu_custom_call.1
$region0: #{tpu_custom_call.1}
  #allocation0 [shape = 'u32[]', space=smem, size = 0x4, offset = 0x4, fixed_abs, tag = 'smem constant byte address 0x4 - core index']
  #allocation1 [shape = 'u32[72,128]{1,0:T(1,128)}', space=vmem, size = 0x9000, scoped, tag = 'internal scratch']
  #allocation6 [shape = 's32[]', space=sflag, size = 0x4, offset = 0, fixed_abs, tag = 'sflag constant byte address 0x0 - dummy sync flag']
  %s0 = inlined_call_operand.hbm [shape: f32[7,48,256], index: 0, kind: input, shape index: {}]
  %s1 = inlined_call_operand.hbm [shape: f32[48,256], index: 1, kind: output, shape index: {}]
  %s2 = sld [smem:[#allocation0]]
  $region41: #{tpu_custom_call.1} parent=0
    _
  %s4 = ssub.s32 1, %s2
  %s5 = scalar_select 0, %s4, %s2
  $region1: #{tpu_custom_call.1} parent=0
    #allocation2 [shape = 'u8[229376]{0}', space=vmem, size = 0x38000, scoped, tag = 'input window, operand 0']
    #allocation3 [shape = 's32[2]{0}', space=sflag, size = 0x8, scoped, tag = 'scoped memory for tpu_custom_call.1']
    #allocation4 [shape = 's32[2]{0}', space=sflag, size = 0x8, scoped, tag = 'scoped memory for tpu_custom_call.1']
    #allocation5 [shape = 'u8[32768]{0}', space=vmem, size = 0x8000, scoped, tag = 'output window, operand 0']
    %6 = vsyncpa [#allocation3], 0
    %s7 = scalar_lea.sflag [#allocation3], 1
    %8 = vsyncpa %s7, 0
    %9 = vsyncpa [#allocation4], 0
    %s10 = scalar_lea.sflag [#allocation4], 1
    %11 = vsyncpa %s10, 0
    loop: start=0, step=1, limit=5
    $region2: #{tpu_custom_call.1} parent=1 // loop_pre_header
      _
    $region3: #{tpu_custom_call.1} parent=1 // loop_header
      %s13 = sphi 0, %s17
      %p14 = scmp.ge.s32.totalorder %s13, 5
      %s23 = sphi 0, %s25
      %s26 = sphi 0, %s23
      %s27 = sphi 0, %s26
      %s43 = sphi 0, %s27
      %s49 = sphi 0, %s51
      %s52 = sphi 0, %s49
      %s53 = sphi 0, %s52
      %s69 = sphi 0, %s53
    $region4: #{tpu_custom_call.1} parent=1 // loop_header_branch
      %16 = sbr.rel (%p14) target = $region8
    $region5: #{tpu_custom_call.1} parent=1 // loop_body
      %s18 = ssub.s32 %s13, 1
      %s19 = ssub.s32 %s13, 2
      %s20 = sadd.s32 %s13, 1
      %s21 = ssub.s32 %s13, %s20
      %p22 = scmp.eq.s32.totalorder %s21, 0
      %s24 = sadd.s32 %s23, 1
      %s25 = scalar_select %p22, %s23, %s24
      %p28 = pneg %p22
      %p29 = scmp.eq.s32.totalorder %s13, 2
      %p30 = por %p28, %p29
      %p31 = scmp.ne.s32.totalorder %s23, %s26
      %p32 = scmp.eq.s32.totalorder %s13, 0
      %p33 = por %p31, %p32
      %p34 = scmp.ne.s32.totalorder %s23, %s26
      %p35 = scmp.eq.s32.totalorder %s18, 2
      %p36 = por %p34, %p35
      %p37 = scmp.ne.s32.totalorder %s26, %s27
      %p38 = scmp.eq.s32.totalorder %s18, 0
      %p39 = por %p37, %p38
      %p40 = scmp.ne.s32.totalorder %s26, %s27
      %p41 = scmp.eq.s32.totalorder %s19, 2
      %p42 = por %p40, %p41
      %p44 = scmp.ne.s32.totalorder %s27, %s43
      %p45 = scmp.eq.s32.totalorder %s19, 0
      %p46 = por %p44, %p45
      %s47 = ssub.s32 %s13, %s20
      %p48 = scmp.eq.s32.totalorder %s47, 0
      %s50 = sadd.s32 %s49, 1
      %s51 = scalar_select %p48, %s49, %s50
      %p54 = pneg %p48
      %p55 = scmp.eq.s32.totalorder %s13, 2
      %p56 = por %p54, %p55
      %p57 = scmp.ne.s32.totalorder %s49, %s52
      %p58 = scmp.eq.s32.totalorder %s13, 0
      %p59 = por %p57, %p58
      %p60 = scmp.ne.s32.totalorder %s49, %s52
      %p61 = scmp.eq.s32.totalorder %s18, 2
      %p62 = por %p60, %p61
      %p63 = scmp.ne.s32.totalorder %s52, %s53
      %p64 = scmp.eq.s32.totalorder %s18, 0
      %p65 = por %p63, %p64
      %p66 = scmp.ne.s32.totalorder %s52, %s53
      %p67 = scmp.eq.s32.totalorder %s19, 2
      %p68 = por %p66, %p67
      %p70 = scmp.ne.s32.totalorder %s53, %s69
      %p71 = scmp.eq.s32.totalorder %s19, 0
      %p72 = por %p70, %p71
      %p73 = scmp.le.s32.totalorder 1, %s13
      %p74 = scmp.lt.s32.totalorder %s13, 4
      %p75 = pnand %p73, %p74
      %p76 = pneg %p75
      // Predicated region
      $region9: #{tpu_custom_call.1} parent=5 // pred_check
        _
      $region10: #{tpu_custom_call.1} parent=5 // pred_check_branch
        %78 = sbr.rel (%p75) target = $region12
      $region11: #{tpu_custom_call.1} parent=5 // pred_region
        %s79 = ssub.s32 %s13, 1
      $region12: #{tpu_custom_call.1} parent=5 // pred_fallthru
        _
      %p80 = scmp.lt.s32.totalorder %s13, 3
      // Predicated region
      $region13: #{tpu_custom_call.1} parent=5 // pred_check
        %p81 = pneg %p80
      $region14: #{tpu_custom_call.1} parent=5 // pred_check_branch
        %83 = sbr.rel (%p81) target = $region16
      $region15: #{tpu_custom_call.1} parent=5 // pred_region
        // Predicated region
        $region17: #{tpu_custom_call.1} parent=15 // pred_check
          %p84 = pneg %p33
        $region18: #{tpu_custom_call.1} parent=15 // pred_check_branch
          %86 = sbr.rel (%p84) target = $region20
        $region19: #{tpu_custom_call.1} parent=15 // pred_region
          #allocation7 [shape = 'u32[6]{0}', space=smem, size = 0x18, scoped, tag = 'DMA stride descriptor']
          %s87 = sand.u32 %s23, 1
          %s88 = scalar_lea.sflag [#allocation3], %s87
          %s89 = sand.u32 %s23, 1
          %s90 = smul.addr %s89, 224
          %s91 = scalar_lea.vmem [#allocation2], %s90
          %s92 = smul.u32 2, %s13
          %94 = vsyncadd %s88, 0
          %s95 = smul.addr %s92, 2
          %s96 = smul.addr %s95, 8
          %s97 = scalar_lea.hbm %s0, %s96
          %s99 = sshll.u32 1, 14
          %s100 = sxor.u32 4294967295, %s99
          %s102 = sld [smem:[#allocation0]]
          %s103 = sadd.s32 2, %s102
          %s105 = sshll.u32 7, 26
          %s106 = sxor.u32 4294967295, %s105
          %s107 = sand.u32 0, %s106
          %s108 = sshll.u32 %s103, 26
          %s109 = sor.u32 %s107, %s108
          %s110 = sshll.u32 %s97, 4
          %s111 = int_to_ptr.hbm [resolvable:$true] %s110
          %s112 = sshll.u32 %s91, 4
          %s113 = int_to_ptr.vmem [resolvable:$true] %s112
          %119 = sst [smem:[#allocation7]] 1536
          %s120 = scalar_lea.smem [#allocation7], 1
          %121 = sst [smem:[%s120]] 512
          %s122 = scalar_lea.smem [#allocation7], 2
          %123 = sst [smem:[%s122]] 2
          %s124 = scalar_lea.smem [#allocation7], 3
          %125 = sst [smem:[%s124]] 256
          %s126 = scalar_lea.smem [#allocation7], 4
          %127 = sst [smem:[%s126]] 256
          %s128 = scalar_lea.smem [#allocation7], 5
          %129 = sst [smem:[%s128]] 16
          %131 = dma.general %s111, 3584, %s113, %s88, [#allocation6], [#allocation7], %s109, 0
        $region20: #{tpu_custom_call.1} parent=15 // pred_fallthru
          _
      $region16: #{tpu_custom_call.1} parent=5 // pred_fallthru
        _
      %p132 = scmp.le.s32.totalorder 1, %s13
      %p133 = scmp.lt.s32.totalorder %s13, 4
      %p134 = pnand %p132, %p133
      %p135 = pneg %p134
      // Predicated region
      $region21: #{tpu_custom_call.1} parent=5 // pred_check
        _
      $region22: #{tpu_custom_call.1} parent=5 // pred_check_branch
        %137 = sbr.rel (%p134) target = $region24
      $region23: #{tpu_custom_call.1} parent=5 // pred_region
        %s138 = ssub.s32 %s13, 1
        %s139 = sand.u32 %s26, 1
        %s140 = scalar_lea.sflag [#allocation3], %s139
        %s141 = sand.u32 %s26, 1
        %s142 = smul.addr %s141, 224
        %s143 = scalar_lea.vmem [#allocation2], %s142
        // Predicated region
        $region25: #{tpu_custom_call.1} parent=23 // pred_check
          %p144 = pneg %p39
        $region26: #{tpu_custom_call.1} parent=23 // pred_check_branch
          %146 = sbr.rel (%p144) target = $region28
        $region27: #{tpu_custom_call.1} parent=23 // pred_region
          %148 = dma.done %s140, 3584
        $region28: #{tpu_custom_call.1} parent=23 // pred_fallthru
          _
        %s149 = sand.u32 %s26, 1
        %s150 = scalar_lea.sflag [#allocation3], %s149
        %s151 = sand.u32 %s26, 1
        %s152 = smul.addr %s151, 224
        %s153 = scalar_lea.vmem [#allocation2], %s152
        %p154 = pneg %p39
        %p155 = pneg %p36
        %p156 = pneg %p65
        %p157 = pneg %p62
        %s158 = sand.u32 %s52, 1
        %s159 = scalar_lea.sflag [#allocation4], %s158
        %s160 = sand.u32 %s52, 1
        %s161 = smul.addr %s160, 32
        %s162 = scalar_lea.vmem [#allocation5], %s161
        %s163 = smul.u32 2, %s18
        %s164 = smul.u32 2, %s18
        %v165 = vld [vmem:[%s143] sm:$0xff]
        %v166 = vld [vmem:[%s143 + $0x8] sm:$0xff]
        %v167 = vld [vmem:[%s143 + $0x10] sm:$0xff]
        %v168 = vld [vmem:[%s143 + $0x18] sm:$0xff]
        %s169 = scalar_lea.vmem %s143, 32 [#allocation2]
        %v170 = vld [vmem:[%s169] sm:$0xff]
        %v171 = vld [vmem:[%s169 + $0x8] sm:$0xff]
        %v172 = vld [vmem:[%s169 + $0x10] sm:$0xff]
        %v173 = vld [vmem:[%s169 + $0x18] sm:$0xff]
        %v174 = vadd.f32 %v165, %v170
        %v175 = vadd.f32 %v166, %v171
        %v176 = vadd.f32 %v167, %v172
        %v177 = vadd.f32 %v168, %v173
        %s178 = scalar_lea.vmem %s143, 64 [#allocation2]
        %v179 = vld [vmem:[%s178] sm:$0xff]
        %v180 = vld [vmem:[%s178 + $0x8] sm:$0xff]
        %v181 = vld [vmem:[%s178 + $0x10] sm:$0xff]
        %v182 = vld [vmem:[%s178 + $0x18] sm:$0xff]
        %v183 = vadd.f32 %v174, %v179
        %v184 = vadd.f32 %v175, %v180
        %v185 = vadd.f32 %v176, %v181
        %v186 = vadd.f32 %v177, %v182
        %s187 = scalar_lea.vmem %s143, 96 [#allocation2]
        %v188 = vld [vmem:[%s187] sm:$0xff]
        %v189 = vld [vmem:[%s187 + $0x8] sm:$0xff]
        %v190 = vld [vmem:[%s187 + $0x10] sm:$0xff]
        %v191 = vld [vmem:[%s187 + $0x18] sm:$0xff]
        %v192 = vadd.f32 %v183, %v188
        %v193 = vadd.f32 %v184, %v189
        %v194 = vadd.f32 %v185, %v190
        %v195 = vadd.f32 %v186, %v191
        %s196 = scalar_lea.vmem %s143, 128 [#allocation2]
        %v197 = vld [vmem:[%s196] sm:$0xff]
        %v198 = vld [vmem:[%s196 + $0x8] sm:$0xff]
        %v199 = vld [vmem:[%s196 + $0x10] sm:$0xff]
        %v200 = vld [vmem:[%s196 + $0x18] sm:$0xff]
        %v201 = vadd.f32 %v192, %v197
        %v202 = vadd.f32 %v193, %v198
        %v203 = vadd.f32 %v194, %v199
        %v204 = vadd.f32 %v195, %v200
        %s205 = scalar_lea.vmem %s143, 160 [#allocation2]
        %v206 = vld [vmem:[%s205] sm:$0xff]
        %v207 = vld [vmem:[%s205 + $0x8] sm:$0xff]
        %v208 = vld [vmem:[%s205 + $0x10] sm:$0xff]
        %v209 = vld [vmem:[%s205 + $0x18] sm:$0xff]
        %v210 = vadd.f32 %v201, %v206
        %v211 = vadd.f32 %v202, %v207
        %v212 = vadd.f32 %v203, %v208
        %v213 = vadd.f32 %v204, %v209
        %vm214 = vcmp.ne.f32.partialorder %v210, %v210
        %vm215 = vcmp.ne.f32.partialorder %v211, %v211
        %vm216 = vcmp.ne.f32.partialorder %v212, %v212
        %vm217 = vcmp.ne.f32.partialorder %v213, %v213
        %s218 = scalar_lea.vmem %s143, 192 [#allocation2]
        %v219 = vld [vmem:[%s218] sm:$0xff]
        %v220 = vld [vmem:[%s218 + $0x8] sm:$0xff]
        %v221 = vld [vmem:[%s218 + $0x10] sm:$0xff]
        %v222 = vld [vmem:[%s218 + $0x18] sm:$0xff]
        %v223 = vcvt.f32.s32.to.zero.pseudo %v219
        %v224 = vcvt.f32.s32.to.zero.pseudo %v220
        %v225 = vcvt.f32.s32.to.zero.pseudo %v221
        %v226 = vcvt.f32.s32.to.zero.pseudo %v222
        %v227 = vand.u32 %v223, 26
        %v228 = vand.u32 %v224, 26
        %v229 = vand.u32 %v225, 26
        %v230 = vand.u32 %v226, 26
        %vm231 = vcmp.ne.s32.totalorder %v227, 0
        %vm232 = vcmp.ne.s32.totalorder %v228, 0
        %vm233 = vcmp.ne.s32.totalorder %v229, 0
        %vm234 = vcmp.ne.s32.totalorder %v230, 0
        %vm235 = vmor %vm231, %vm214
        %vm236 = vmor %vm232, %vm215
        %vm237 = vmor %vm233, %vm216
        %vm238 = vmor %vm234, %vm217
        %v239 = vsel %vm235, nan, 1.0
        %v240 = vsel %vm236, nan, 1.0
        %v241 = vsel %vm237, nan, 1.0
        %v242 = vsel %vm238, nan, 1.0
        %243 = vst [vmem:[%s162] sm:$0xff] %v239
        %244 = vst [vmem:[%s162 + $0x8] sm:$0xff] %v240
        %245 = vst [vmem:[%s162 + $0x10] sm:$0xff] %v241
        %246 = vst [vmem:[%s162 + $0x18] sm:$0xff] %v242
        %s247 = sand.u32 %s52, 1
        %s248 = scalar_lea.sflag [#allocation4], %s247
        %s249 = sand.u32 %s52, 1
        %s250 = smul.addr %s249, 32
        %s251 = scalar_lea.vmem [#allocation5], %s250
        // Predicated region
        $region29: #{tpu_custom_call.1} parent=23 // pred_check
          %p252 = pneg %p62
        $region30: #{tpu_custom_call.1} parent=23 // pred_check_branch
          %254 = sbr.rel (%p252) target = $region32
        $region31: #{tpu_custom_call.1} parent=23 // pred_region
          %s255 = smul.u32 2, %s18
          %257 = vsyncadd %s248, 0
          %s258 = smul.addr %s255, 2
          %s259 = smul.addr %s258, 8
          %s260 = scalar_lea.hbm %s1, %s259
          %s261 = sshll.u32 %s251, 4
          %s262 = int_to_ptr.vmem [resolvable:$true] %s261
          %s263 = sshll.u32 %s260, 4
          %s264 = int_to_ptr.hbm [resolvable:$true] %s263
          %269 = dma.vmem_to_hbm [thread:$0]  %s262, 512, %s264, %s248, 256, 256, 16
        $region32: #{tpu_custom_call.1} parent=23 // pred_fallthru
          _
      $region24: #{tpu_custom_call.1} parent=5 // pred_fallthru
        _
      %p270 = scmp.le.s32.totalorder 2, %s13
      // Predicated region
      $region33: #{tpu_custom_call.1} parent=5 // pred_check
        %p271 = pneg %p270
      $region34: #{tpu_custom_call.1} parent=5 // pred_check_branch
        %273 = sbr.rel (%p271) target = $region36
      $region35: #{tpu_custom_call.1} parent=5 // pred_region
        %s274 = ssub.s32 %s13, 2
        // Predicated region
        $region37: #{tpu_custom_call.1} parent=35 // pred_check
          %p275 = pneg %p68
        $region38: #{tpu_custom_call.1} parent=35 // pred_check_branch
          %277 = sbr.rel (%p275) target = $region40
        $region39: #{tpu_custom_call.1} parent=35 // pred_region
          %s278 = sand.u32 %s53, 1
          %s279 = scalar_lea.sflag [#allocation4], %s278
          %s280 = sand.u32 %s53, 1
          %s281 = smul.addr %s280, 32
          %s282 = scalar_lea.vmem [#allocation5], %s281
          %284 = dma.done %s279, 512
        $region40: #{tpu_custom_call.1} parent=35 // pred_fallthru
          _
      $region36: #{tpu_custom_call.1} parent=5 // pred_fallthru
        _
    $region6: #{tpu_custom_call.1} parent=1 // loop_footer
      %s17 = sadd.s32 1, %s13
    $region7: #{tpu_custom_call.1} parent=1 // loop_footer_branch
      %12 = sbr.rel target = $region3
    $region8: #{tpu_custom_call.1} parent=1 // loop_exit
      _
    %285 = vsyncpa [#allocation3], 1
    %s286 = scalar_lea.sflag [#allocation3], 1
    %287 = vsyncpa %s286, 1
    %288 = vsyncpa [#allocation4], 1
    %s289 = scalar_lea.sflag [#allocation4], 1
    %290 = vsyncpa %s289, 1

</llo_original>
